<compile_context>
chip_gen: v5e
topology: v5e:2x2
jax: 0.10.0
libtpu: 0.0.40
codegen_flags: <defaults>
</compile_context>

<pallas_src>
import functools

import jax
import jax.numpy as jnp
from jax import lax
from jax.experimental import pallas as pl
from jax.experimental.pallas import tpu as pltpu


def _round_up(x, m):
    return ((x + m - 1) // m) * m


def _cdiv(a, b):
    return -(-a // b)


def _disc_kernel(x_ref, w1s_ref, w2s_ref, wf_ref, w2_ref, b_ref, out_ref, *,
                 s_live, w_hid, w_out):
    """One batch tile: 4 MXU matmuls (fc3_state/fc1 fused) + VPU/XLU row-dot head."""
    f32 = jnp.float32
    mdt = w2s_ref.dtype            # MXU input dtype (bf16 or f32)

    x = x_ref[...]                 # (tb, sk)   mxu dtype
    b = b_ref[...]                 # (8, wb)    f32 biases / fc3-weight row

    # fc1_state -> relu
    h = jnp.dot(x, w1s_ref[...], preferred_element_type=f32) + b[0:1, :w_hid]
    h = jnp.maximum(h, 0.0)
    # fc2_state -> relu
    h = jnp.dot(h.astype(mdt), w2s_ref[...], preferred_element_type=f32) + b[1:2, :w_hid]
    h = jnp.maximum(h, 0.0)

    # Fused fc3_state || fc1-preact: columns [0:Wout) hold W3s (-> x_state),
    # columns [Wout:Wout+W) hold W3s@W1 (-> fc1 pre-activation).  One matmul.
    fused = jnp.dot(h.astype(mdt), wf_ref[...], preferred_element_type=f32)   # (tb, w_out + w_hid)
    x_state = fused[:, :w_out] + b[2:3, :w_out]                # lanes >= S are exactly 0
    g = jnp.maximum(fused[:, w_out:] + b[3:4, :w_hid], 0.0)    # relu(fc1(x_state))

    # fc2 -> relu
    g = jnp.dot(g.astype(mdt), w2_ref[...], preferred_element_type=f32) + b[4:5, :w_hid]
    g = jnp.maximum(g, 0.0)

    # fc3 (H -> 1) as a VPU multiply + XLU lane-reduce (avoid an N=1 MXU pass on the
    # fully serial chain).  Transposed fc3 weight lives in bias-slab row 5.
    logit = jnp.sum(g * b[5:6, :w_hid], axis=-1, keepdims=True)     # (tb, 1)
    # b3 is lane-replicated in row 6; replicating prob only across the Wout output
    # lanes (not W) keeps EUP/VPU work independent of the hidden size.
    prob = jax.nn.sigmoid(logit + b[6:7, :w_out])                   # (tb, w_out)

    # Single lane-dense output slab: lanes [0, S) carry x_state, lanes >= S carry prob.
    lane = lax.broadcasted_iota(jnp.int32, out_ref.shape, 1)
    out_ref[...] = jnp.where(lane < s_live, x_state, prob)


def _pack_params(params, S, H, W, Wout, Sk, Wb, mxu_dtype):
    """Pack the 6 Linear layers into 4 weight slabs + one bias/head slab."""
    f32 = jnp.float32
    hi = jax.lax.Precision.HIGHEST

    w1s = params["w1_state"].astype(f32)
    w2s = params["w2_state"].astype(f32)
    w3s = params["w3_state"].astype(f32)
    w1 = params["w1"].astype(f32)
    w2 = params["w2"].astype(f32)
    w3 = params["w3"].astype(f32)

    b1s = params["b1_state"].astype(f32).reshape(-1)
    b2s = params["b2_state"].astype(f32).reshape(-1)
    b3s = params["b3_state"].astype(f32).reshape(-1)
    b1 = params["b1"].astype(f32).reshape(-1)
    b2 = params["b2"].astype(f32).reshape(-1)
    b3 = params["b3"].astype(f32).reshape(-1)

    # Affine fusion of fc3_state -> fc1:
    #   x_state @ W1 + b1 == h @ (W3s @ W1) + (b3s @ W1 + b1)
    w_fc1_fused = jnp.dot(w3s, w1, precision=hi)                # (H, H)
    b_fc1_fused = jnp.dot(b3s, w1, precision=hi) + b1           # (H,)

    w1s_slab = jnp.zeros((Sk, W), f32).at[:S, :H].set(w1s)
    w2s_slab = jnp.zeros((W, W), f32).at[:H, :H].set(w2s)
    wf_slab = (jnp.zeros((W, Wout + W), f32)
               .at[:H, :S].set(w3s)                             # -> x_state
               .at[:H, Wout:Wout + H].set(w_fc1_fused))         # -> fc1 pre-activation
    w2_slab = jnp.zeros((W, W), f32).at[:H, :H].set(w2)

    b_slab = jnp.zeros((8, Wb), f32)
    b_slab = b_slab.at[0, :H].set(b1s)
    b_slab = b_slab.at[1, :H].set(b2s)
    b_slab = b_slab.at[2, :S].set(b3s)
    b_slab = b_slab.at[3, :H].set(b_fc1_fused)
    b_slab = b_slab.at[4, :H].set(b2)
    b_slab = b_slab.at[5, :H].set(w3[:, 0])                     # fc3 weight, transposed row
    b_slab = b_slab.at[6, :].set(b3[0])                         # fc3 bias, lane-replicated

    md = mxu_dtype
    return (w1s_slab.astype(md), w2s_slab.astype(md),
            wf_slab.astype(md), w2_slab.astype(md), b_slab)


def discriminator_interpolation(state_s, params, *, block_batch=2048,
                                mxu_dtype=jnp.bfloat16):
    """Fused forward pass. Returns (prob [B, 1], x_state [B, S])."""
    B, S = state_s.shape
    H = params["w1_state"].shape[1]
    assert params["w2_state"].shape[0] == H, "requires hidden_size_state == hidden_size"

    W = _round_up(H, 128)            # lane-padded hidden width
    Wout = _round_up(S + 1, 128)     # lane-padded output-slab width (x_state + prob lane)
    Sk = _round_up(S, 8)             # sublane-aligned input feature rows
    Wb = max(W, Wout)                # bias/head slab width

    Bp8 = _round_up(B, 8)
    # Batch tile: multiple of 8, capped by block_batch and by ceil(B/2) so any batch
    # >= 16 gives at least two grid tiles (both v7x TensorCores get work).
    TB = max(8, min(_round_up(block_batch, 8), _round_up(_cdiv(Bp8, 2), 8)))
    Bp = _round_up(B, TB)

    x_pad = (jnp.zeros((Bp, Sk), jnp.float32)
             .at[:B, :S].set(state_s.astype(jnp.float32))).astype(mxu_dtype)
    w1s_slab, w2s_slab, wf_slab, w2_slab, b_slab = _pack_params(
        params, S, H, W, Wout, Sk, Wb, mxu_dtype)

    kernel = functools.partial(_disc_kernel, s_live=S, w_hid=W, w_out=Wout)

    # Scoped-VMEM budget: actual slab + double-buffered tile bytes with generous
    # headroom, never below the 32 MiB default, capped under v7x's 64 MiB physical.
    mxu_bytes = jnp.dtype(mxu_dtype).itemsize
    weight_bytes = (Sk * W + 2 * W * W + W * (Wout + W)) * mxu_bytes + 8 * Wb * 4
    io_bytes = 2 * TB * Sk * mxu_bytes + 2 * TB * Wout * 4
    vmem_limit = int(min(max(4 * (weight_bytes + io_bytes) + (8 << 20), 32 << 20), 56 << 20))

    def build(weight_pipeline_mode):
        def wspec(shape):
            kwargs = {}
            if weight_pipeline_mode is not None:
                kwargs["pipeline_mode"] = weight_pipeline_mode
            return pl.BlockSpec(shape, lambda i: (0,) * len(shape), **kwargs)

        return pl.pallas_call(
            kernel,
            out_shape=jax.ShapeDtypeStruct((Bp, Wout), jnp.float32),
            grid=(Bp // TB,),
            in_specs=[
                pl.BlockSpec((TB, Sk), lambda i: (i, 0)),   # streamed batch tile
                wspec((Sk, W)),                             # fc1_state weight (resident)
                wspec((W, W)),                              # fc2_state weight (resident)
                wspec((W, Wout + W)),                       # fused fc3_state || fc1 (resident)
                wspec((W, W)),                              # fc2 weight (resident)
                wspec((8, Wb)),                             # biases + fc3 row (resident)
            ],
            out_specs=pl.BlockSpec((TB, Wout), lambda i: (i, 0)),   # lane-dense output slab
            compiler_params=pltpu.CompilerParams(
                dimension_semantics=("parallel",),          # megacore-shard batch tiles
                vmem_limit_bytes=vmem_limit,
            ),
        )

    args = (x_pad, w1s_slab, w2s_slab, wf_slab, w2_slab, b_slab)
    try:
        # Constant index_map => single-buffer the resident weights (halves their VMEM).
        out = build(pl.Buffered(1))(*args)
    except Exception:
        # JAX build without BlockSpec.pipeline_mode support: default double-buffering.
        out = build(None)(*args)

    prob = out[:B, S:S + 1]
    x_state = out[:B, :S]
    return prob, x_state


def init_params(key, state_num_inputs, hidden_size):
    """Deterministic synthetic parameters (shapes from the module __init__)."""
    S, H = state_num_inputs, hidden_size
    ks = jax.random.split(key, 12)

    def lin(kw, kb, fan_in, fan_out):
        scale = 1.0 / jnp.sqrt(jnp.float32(fan_in))
        w = jax.random.uniform(kw, (fan_in, fan_out), jnp.float32, -scale, scale)
        b = jax.random.uniform(kb, (1, fan_out), jnp.float32, -scale, scale)
        return w, b

    w1s, b1s = lin(ks[0], ks[1], S, H)   # fc1_state: S -> hidden_size_state (== H)
    w2s, b2s = lin(ks[2], ks[3], H, H)   # fc2_state: H -> H
    w3s, b3s = lin(ks[4], ks[5], H, S)   # fc3_state: H -> S
    w1, b1 = lin(ks[6], ks[7], S, H)     # fc1: S -> H
    w2, b2 = lin(ks[8], ks[9], H, H)     # fc2: H -> H
    w3, b3 = lin(ks[10], ks[11], H, 1)   # fc3: H -> 1

    return dict(
        w1_state=w1s, b1_state=b1s,
        w2_state=w2s, b2_state=b2s,
        w3_state=w3s, b3_state=b3s,
        w1=w1, b1=b1, w2=w2, b2=b2, w3=w3, b3=b3,
    )


def _reference_forward(x, p):
    """Pure-JAX reference mirroring the PyTorch forward, for validation."""
    h = jax.nn.relu(x @ p["w1_state"] + p["b1_state"])
    h = jax.nn.relu(h @ p["w2_state"] + p["b2_state"])
    x_state = h @ p["w3_state"] + p["b3_state"]
    g = jax.nn.relu(x_state @ p["w1"] + p["b1"])
    g = jax.nn.relu(g @ p["w2"] + p["b2"])
    prob = jax.nn.sigmoid(g @ p["w3"] + p["b3"])
    return prob, x_state


if __name__ == "__main__":
    key = jax.random.PRNGKey(0)
    k_in, k_params, k_in2 = jax.random.split(key, 3)

    B = 2              # batch
    STATE_DIM = 16     # state_num_inputs
    HIDDEN = 32        # args.hidden_size (== args.hidden_size_state)
    params = init_params(k_params, STATE_DIM, HIDDEN)

    state_s = jax.random.normal(k_in, (B, STATE_DIM), jnp.float32)
    ref_prob, ref_x_state = _reference_forward(state_s, params)

    # fp32 MXU path: tight tolerance (only the affine-fusion reassociation differs).
    prob32, x_state32 = discriminator_interpolation(state_s, params, mxu_dtype=jnp.float32)
    jax.block_until_ready((prob32, x_state32))
    assert prob32.shape == (B, 1) and x_state32.shape == (B, STATE_DIM)
    assert jnp.allclose(prob32, ref_prob, rtol=1e-4, atol=1e-4)
    assert jnp.allclose(x_state32, ref_x_state, rtol=1e-4, atol=1e-4)

    # Default bf16-MXU path (f32 accumulation / bias / activations): looser tolerance.
    prob_bf, x_state_bf = discriminator_interpolation(state_s, params)
    jax.block_until_ready((prob_bf, x_state_bf))
    assert prob_bf.shape == (B, 1) and x_state_bf.shape == (B, STATE_DIM)
    assert jnp.allclose(prob_bf, ref_prob, rtol=5e-2, atol=5e-2)
    assert jnp.allclose(x_state_bf, ref_x_state, rtol=5e-2, atol=5e-2)

    # Multi-tile check: ragged batch, non-multiple-of-8 block_batch (robustness fix),
    # >= 2 grid tiles and resident weights reused across grid steps.
    B2 = 300
    state_s2 = jax.random.normal(k_in2, (B2, STATE_DIM), jnp.float32)
    ref_prob2, ref_x2 = _reference_forward(state_s2, params)
    prob2, x2 = discriminator_interpolation(state_s2, params, block_batch=100)
    jax.block_until_ready((prob2, x2))
    assert prob2.shape == (B2, 1) and x2.shape == (B2, STATE_DIM)
    assert jnp.allclose(prob2, ref_prob2, rtol=5e-2, atol=5e-2)
    assert jnp.allclose(x2, ref_x2, rtol=5e-2, atol=5e-2)

    print("KERNEL_OK")
</pallas_src>

<mosaic_0001>
module attributes {stable_mosaic.version = 11 : i64} {
  func.func @_disc_kernel(%arg0: i32, %arg1: memref<8x16xf32, #tpu.memory_space<vmem>>, %arg2: memref<16x128xf32, #tpu.memory_space<vmem>>, %arg3: memref<128x128xf32, #tpu.memory_space<vmem>>, %arg4: memref<128x256xf32, #tpu.memory_space<vmem>>, %arg5: memref<128x128xf32, #tpu.memory_space<vmem>>, %arg6: memref<8x128xf32, #tpu.memory_space<vmem>>, %arg7: memref<8x128xf32, #tpu.memory_space<vmem>>) attributes {dimension_semantics = [#tpu.dimension_semantics<parallel>], iteration_bounds = array<i64: 1>, scalar_prefetch = 0 : i64, scratch_operands = 0 : i64, tpu.core_type = #tpu.core_type<tc>, window_params = [{transform_indices = @transform_0, window_bounds = array<i64: 8, 16>}, {pipeline_mode = #tpu.pipeline_mode<synchronous>, transform_indices = @transform_1, window_bounds = array<i64: 16, 128>}, {pipeline_mode = #tpu.pipeline_mode<synchronous>, transform_indices = @transform_2, window_bounds = array<i64: 128, 128>}, {pipeline_mode = #tpu.pipeline_mode<synchronous>, transform_indices = @transform_3, window_bounds = array<i64: 128, 256>}, {pipeline_mode = #tpu.pipeline_mode<synchronous>, transform_indices = @transform_4, window_bounds = array<i64: 128, 128>}, {pipeline_mode = #tpu.pipeline_mode<synchronous>, transform_indices = @transform_5, window_bounds = array<i64: 8, 128>}, {transform_indices = @transform_6, window_bounds = array<i64: 8, 128>}]} {
    %c0 = arith.constant 0 : index
    %c0_0 = arith.constant 0 : index
    %0 = vector.load %arg1[%c0, %c0_0] : memref<8x16xf32, #tpu.memory_space<vmem>>, vector<8x16xf32>
    %c0_1 = arith.constant 0 : index
    %c0_2 = arith.constant 0 : index
    %1 = vector.load %arg6[%c0_1, %c0_2] : memref<8x128xf32, #tpu.memory_space<vmem>>, vector<8x128xf32>
    %c0_3 = arith.constant 0 : index
    %c0_4 = arith.constant 0 : index
    %2 = vector.load %arg2[%c0_3, %c0_4] : memref<16x128xf32, #tpu.memory_space<vmem>>, vector<16x128xf32>
    %cst = arith.constant dense<0.000000e+00> : vector<8x128xf32>
    %3 = tpu.matmul %0, %2, %cst {dimension_numbers = #tpu.dot_dimension_numbers<[1], [0], [0], [1], [0, 0, 1, 1], [], []>} : vector<8x16xf32>, vector<16x128xf32>, vector<8x128xf32> -> vector<8x128xf32>
    %4 = vector.extract_strided_slice %1 {offsets = [0, 0], sizes = [1, 128], strides = [1, 1]} : vector<8x128xf32> to vector<1x128xf32>
    %5 = vector.broadcast %4 : vector<1x128xf32> to vector<8x128xf32>
    %6 = arith.addf %3, %5 : vector<8x128xf32>
    %cst_5 = arith.constant 0.000000e+00 : f32
    %7 = vector.broadcast %cst_5 : f32 to vector<8x128xf32>
    %8 = arith.maximumf %6, %7 : vector<8x128xf32>
    %c0_6 = arith.constant 0 : index
    %c0_7 = arith.constant 0 : index
    %9 = vector.load %arg3[%c0_6, %c0_7] : memref<128x128xf32, #tpu.memory_space<vmem>>, vector<128x128xf32>
    %cst_8 = arith.constant dense<0.000000e+00> : vector<8x128xf32>
    %10 = tpu.matmul %8, %9, %cst_8 {dimension_numbers = #tpu.dot_dimension_numbers<[1], [0], [0], [1], [0, 0, 1, 1], [], []>} : vector<8x128xf32>, vector<128x128xf32>, vector<8x128xf32> -> vector<8x128xf32>
    %11 = vector.extract_strided_slice %1 {offsets = [1, 0], sizes = [1, 128], strides = [1, 1]} : vector<8x128xf32> to vector<1x128xf32>
    %12 = vector.broadcast %11 : vector<1x128xf32> to vector<8x128xf32>
    %13 = arith.addf %10, %12 : vector<8x128xf32>
    %cst_9 = arith.constant 0.000000e+00 : f32
    %14 = vector.broadcast %cst_9 : f32 to vector<8x128xf32>
    %15 = arith.maximumf %13, %14 : vector<8x128xf32>
    %c0_10 = arith.constant 0 : index
    %c0_11 = arith.constant 0 : index
    %16 = vector.load %arg4[%c0_10, %c0_11] : memref<128x256xf32, #tpu.memory_space<vmem>>, vector<128x256xf32>
    %cst_12 = arith.constant dense<0.000000e+00> : vector<8x256xf32>
    %17 = tpu.matmul %15, %16, %cst_12 {dimension_numbers = #tpu.dot_dimension_numbers<[1], [0], [0], [1], [0, 0, 1, 1], [], []>} : vector<8x128xf32>, vector<128x256xf32>, vector<8x256xf32> -> vector<8x256xf32>
    %18 = vector.extract_strided_slice %17 {offsets = [0, 0], sizes = [8, 128], strides = [1, 1]} : vector<8x256xf32> to vector<8x128xf32>
    %19 = vector.extract_strided_slice %1 {offsets = [2, 0], sizes = [1, 128], strides = [1, 1]} : vector<8x128xf32> to vector<1x128xf32>
    %20 = vector.broadcast %19 : vector<1x128xf32> to vector<8x128xf32>
    %21 = arith.addf %18, %20 : vector<8x128xf32>
    %22 = vector.extract_strided_slice %17 {offsets = [0, 128], sizes = [8, 128], strides = [1, 1]} : vector<8x256xf32> to vector<8x128xf32>
    %23 = vector.extract_strided_slice %1 {offsets = [3, 0], sizes = [1, 128], strides = [1, 1]} : vector<8x128xf32> to vector<1x128xf32>
    %24 = vector.broadcast %23 : vector<1x128xf32> to vector<8x128xf32>
    %25 = arith.addf %22, %24 : vector<8x128xf32>
    %cst_13 = arith.constant 0.000000e+00 : f32
    %26 = vector.broadcast %cst_13 : f32 to vector<8x128xf32>
    %27 = arith.maximumf %25, %26 : vector<8x128xf32>
    %c0_14 = arith.constant 0 : index
    %c0_15 = arith.constant 0 : index
    %28 = vector.load %arg5[%c0_14, %c0_15] : memref<128x128xf32, #tpu.memory_space<vmem>>, vector<128x128xf32>
    %cst_16 = arith.constant dense<0.000000e+00> : vector<8x128xf32>
    %29 = tpu.matmul %27, %28, %cst_16 {dimension_numbers = #tpu.dot_dimension_numbers<[1], [0], [0], [1], [0, 0, 1, 1], [], []>} : vector<8x128xf32>, vector<128x128xf32>, vector<8x128xf32> -> vector<8x128xf32>
    %30 = vector.extract_strided_slice %1 {offsets = [4, 0], sizes = [1, 128], strides = [1, 1]} : vector<8x128xf32> to vector<1x128xf32>
    %31 = vector.broadcast %30 : vector<1x128xf32> to vector<8x128xf32>
    %32 = arith.addf %29, %31 : vector<8x128xf32>
    %cst_17 = arith.constant 0.000000e+00 : f32
    %33 = vector.broadcast %cst_17 : f32 to vector<8x128xf32>
    %34 = arith.maximumf %32, %33 : vector<8x128xf32>
    %35 = vector.extract_strided_slice %1 {offsets = [5, 0], sizes = [1, 128], strides = [1, 1]} : vector<8x128xf32> to vector<1x128xf32>
    %36 = vector.broadcast %35 : vector<1x128xf32> to vector<8x128xf32>
    %37 = arith.mulf %34, %36 : vector<8x128xf32>
    %cst_18 = arith.constant dense<0.000000e+00> : vector<8xf32>
    %38 = vector.multi_reduction <add>, %37, %cst_18 [1] : vector<8x128xf32> to vector<8xf32>
    %39 = vector.shape_cast %38 : vector<8xf32> to vector<8x1xf32>
    %40 = vector.extract_strided_slice %1 {offsets = [6, 0], sizes = [1, 128], strides = [1, 1]} : vector<8x128xf32> to vector<1x128xf32>
    %41 = vector.broadcast %39 : vector<8x1xf32> to vector<8x128xf32>
    %42 = vector.broadcast %40 : vector<1x128xf32> to vector<8x128xf32>
    %43 = arith.addf %41, %42 : vector<8x128xf32>
    %44 = arith.negf %43 : vector<8x128xf32>
    %45 = math.exp %44 : vector<8x128xf32>
    %cst_19 = arith.constant 1.000000e+00 : f32
    %46 = vector.broadcast %cst_19 : f32 to vector<8x128xf32>
    %47 = arith.addf %46, %45 : vector<8x128xf32>
    %48 = arith.divf %46, %47 : vector<8x128xf32>
    %49 = tpu.iota {dimensions = array<i32: 1>} : vector<8x128xi32>
    %c16_i32 = arith.constant 16 : i32
    %50 = vector.broadcast %c16_i32 : i32 to vector<8x128xi32>
    %51 = arith.cmpi slt, %49, %50 : vector<8x128xi32>
    %52 = arith.select %51, %21, %48 : vector<8x128xi1>, vector<8x128xf32>
    %c0_20 = arith.constant 0 : index
    %c0_21 = arith.constant 0 : index
    %53 = vector.load %arg7[%c0_20, %c0_21] : memref<8x128xf32, #tpu.memory_space<vmem>>, vector<8x128xf32>
    tpu.vector_store %arg7[%c0_20, %c0_21], %52 {strides = array<i32>} : memref<8x128xf32, #tpu.memory_space<vmem>>, vector<8x128xf32>,
    return
  }
  func.func @transform_0(%arg0: i32) -> (i32, i32) {
    %c0_i32 = arith.constant 0 : i32
    %c0_i32_0 = arith.constant 0 : i32
    return %arg0, %c0_i32 : i32, i32
  }
  func.func @transform_1(%arg0: i32) -> (i32, i32) {
    %c0_i32 = arith.constant 0 : i32
    %c0_i32_0 = arith.constant 0 : i32
    %c0_i32_1 = arith.constant 0 : i32
    return %c0_i32, %c0_i32_0 : i32, i32
  }
  func.func @transform_2(%arg0: i32) -> (i32, i32) {
    %c0_i32 = arith.constant 0 : i32
    %c0_i32_0 = arith.constant 0 : i32
    %c0_i32_1 = arith.constant 0 : i32
    return %c0_i32, %c0_i32_0 : i32, i32
  }
  func.func @transform_3(%arg0: i32) -> (i32, i32) {
    %c0_i32 = arith.constant 0 : i32
    %c0_i32_0 = arith.constant 0 : i32
    %c0_i32_1 = arith.constant 0 : i32
    return %c0_i32, %c0_i32_0 : i32, i32
  }
  func.func @transform_4(%arg0: i32) -> (i32, i32) {
    %c0_i32 = arith.constant 0 : i32
    %c0_i32_0 = arith.constant 0 : i32
    %c0_i32_1 = arith.constant 0 : i32
    return %c0_i32, %c0_i32_0 : i32, i32
  }
  func.func @transform_5(%arg0: i32) -> (i32, i32) {
    %c0_i32 = arith.constant 0 : i32
    %c0_i32_0 = arith.constant 0 : i32
    %c0_i32_1 = arith.constant 0 : i32
    return %c0_i32, %c0_i32_0 : i32, i32
  }
  func.func @transform_6(%arg0: i32) -> (i32, i32) {
    %c0_i32 = arith.constant 0 : i32
    %c0_i32_0 = arith.constant 0 : i32
    return %arg0, %c0_i32 : i32, i32
  }
}

module attributes {stable_mosaic.version = 11 : i64} {
  func.func @_disc_kernel(%arg0: i32, %arg1: memref<8x16xf32, #tpu.memory_space<vmem>>, %arg2: memref<16x128xf32, #tpu.memory_space<vmem>>, %arg3: memref<128x128xf32, #tpu.memory_space<vmem>>, %arg4: memref<128x256xf32, #tpu.memory_space<vmem>>, %arg5: memref<128x128xf32, #tpu.memory_space<vmem>>, %arg6: memref<8x128xf32, #tpu.memory_space<vmem>>, %arg7: memref<8x128xf32, #tpu.memory_space<vmem>>) attributes {dimension_semantics = [#tpu.dimension_semantics<parallel>], iteration_bounds = array<i64: 1>, scalar_prefetch = 0 : i64, scratch_operands = 0 : i64, tpu.core_type = #tpu.core_type<tc>, window_params = [{transform_indices = @transform_0, window_bounds = array<i64: 8, 16>}, {pipeline_mode = #tpu.pipeline_mode<synchronous>, transform_indices = @transform_1, window_bounds = array<i64: 16, 128>}, {pipeline_mode = #tpu.pipeline_mode<synchronous>, transform_indices = @transform_2, window_bounds = array<i64: 128, 128>}, {pipeline_mode = #tpu.pipeline_mode<synchronous>, transform_indices = @transform_3, window_bounds = array<i64: 128, 256>}, {pipeline_mode = #tpu.pipeline_mode<synchronous>, transform_indices = @transform_4, window_bounds = array<i64: 128, 128>}, {pipeline_mode = #tpu.pipeline_mode<synchronous>, transform_indices = @transform_5, window_bounds = array<i64: 8, 128>}, {transform_indices = @transform_6, window_bounds = array<i64: 8, 128>}]} {
    %c0 = arith.constant 0 : index
    %c0_0 = arith.constant 0 : index
    %0 = vector.load %arg1[%c0, %c0_0] : memref<8x16xf32, #tpu.memory_space<vmem>>, vector<8x16xf32>
    %c0_1 = arith.constant 0 : index
    %c0_2 = arith.constant 0 : index
    %1 = vector.load %arg6[%c0_1, %c0_2] : memref<8x128xf32, #tpu.memory_space<vmem>>, vector<8x128xf32>
    %c0_3 = arith.constant 0 : index
    %c0_4 = arith.constant 0 : index
    %2 = vector.load %arg2[%c0_3, %c0_4] : memref<16x128xf32, #tpu.memory_space<vmem>>, vector<16x128xf32>
    %cst = arith.constant dense<0.000000e+00> : vector<8x128xf32>
    %3 = tpu.matmul %0, %2, %cst {dimension_numbers = #tpu.dot_dimension_numbers<[1], [0], [0], [1], [0, 0, 1, 1], [], []>} : vector<8x16xf32>, vector<16x128xf32>, vector<8x128xf32> -> vector<8x128xf32>
    %4 = vector.extract_strided_slice %1 {offsets = [0, 0], sizes = [1, 128], strides = [1, 1]} : vector<8x128xf32> to vector<1x128xf32>
    %5 = vector.broadcast %4 : vector<1x128xf32> to vector<8x128xf32>
    %6 = arith.addf %3, %5 : vector<8x128xf32>
    %cst_5 = arith.constant 0.000000e+00 : f32
    %7 = vector.broadcast %cst_5 : f32 to vector<8x128xf32>
    %8 = arith.maximumf %6, %7 : vector<8x128xf32>
    %c0_6 = arith.constant 0 : index
    %c0_7 = arith.constant 0 : index
    %9 = vector.load %arg3[%c0_6, %c0_7] : memref<128x128xf32, #tpu.memory_space<vmem>>, vector<128x128xf32>
    %cst_8 = arith.constant dense<0.000000e+00> : vector<8x128xf32>
    %10 = tpu.matmul %8, %9, %cst_8 {dimension_numbers = #tpu.dot_dimension_numbers<[1], [0], [0], [1], [0, 0, 1, 1], [], []>} : vector<8x128xf32>, vector<128x128xf32>, vector<8x128xf32> -> vector<8x128xf32>
    %11 = vector.extract_strided_slice %1 {offsets = [1, 0], sizes = [1, 128], strides = [1, 1]} : vector<8x128xf32> to vector<1x128xf32>
    %12 = vector.broadcast %11 : vector<1x128xf32> to vector<8x128xf32>
    %13 = arith.addf %10, %12 : vector<8x128xf32>
    %cst_9 = arith.constant 0.000000e+00 : f32
    %14 = vector.broadcast %cst_9 : f32 to vector<8x128xf32>
    %15 = arith.maximumf %13, %14 : vector<8x128xf32>
    %c0_10 = arith.constant 0 : index
    %c0_11 = arith.constant 0 : index
    %16 = vector.load %arg4[%c0_10, %c0_11] : memref<128x256xf32, #tpu.memory_space<vmem>>, vector<128x256xf32>
    %cst_12 = arith.constant dense<0.000000e+00> : vector<8x256xf32>
    %17 = tpu.matmul %15, %16, %cst_12 {dimension_numbers = #tpu.dot_dimension_numbers<[1], [0], [0], [1], [0, 0, 1, 1], [], []>} : vector<8x128xf32>, vector<128x256xf32>, vector<8x256xf32> -> vector<8x256xf32>
    %18 = vector.extract_strided_slice %17 {offsets = [0, 0], sizes = [8, 128], strides = [1, 1]} : vector<8x256xf32> to vector<8x128xf32>
    %19 = vector.extract_strided_slice %1 {offsets = [2, 0], sizes = [1, 128], strides = [1, 1]} : vector<8x128xf32> to vector<1x128xf32>
    %20 = vector.broadcast %19 : vector<1x128xf32> to vector<8x128xf32>
    %21 = arith.addf %18, %20 : vector<8x128xf32>
    %22 = vector.extract_strided_slice %17 {offsets = [0, 128], sizes = [8, 128], strides = [1, 1]} : vector<8x256xf32> to vector<8x128xf32>
    %23 = vector.extract_strided_slice %1 {offsets = [3, 0], sizes = [1, 128], strides = [1, 1]} : vector<8x128xf32> to vector<1x128xf32>
    %24 = vector.broadcast %23 : vector<1x128xf32> to vector<8x128xf32>
    %25 = arith.addf %22, %24 : vector<8x128xf32>
    %cst_13 = arith.constant 0.000000e+00 : f32
    %26 = vector.broadcast %cst_13 : f32 to vector<8x128xf32>
    %27 = arith.maximumf %25, %26 : vector<8x128xf32>
    %c0_14 = arith.constant 0 : index
    %c0_15 = arith.constant 0 : index
    %28 = vector.load %arg5[%c0_14, %c0_15] : memref<128x128xf32, #tpu.memory_space<vmem>>, vector<128x128xf32>
    %cst_16 = arith.constant dense<0.000000e+00> : vector<8x128xf32>
    %29 = tpu.matmul %27, %28, %cst_16 {dimension_numbers = #tpu.dot_dimension_numbers<[1], [0], [0], [1], [0, 0, 1, 1], [], []>} : vector<8x128xf32>, vector<128x128xf32>, vector<8x128xf32> -> vector<8x128xf32>
    %30 = vector.extract_strided_slice %1 {offsets = [4, 0], sizes = [1, 128], strides = [1, 1]} : vector<8x128xf32> to vector<1x128xf32>
    %31 = vector.broadcast %30 : vector<1x128xf32> to vector<8x128xf32>
    %32 = arith.addf %29, %31 : vector<8x128xf32>
    %cst_17 = arith.constant 0.000000e+00 : f32
    %33 = vector.broadcast %cst_17 : f32 to vector<8x128xf32>
    %34 = arith.maximumf %32, %33 : vector<8x128xf32>
    %35 = vector.extract_strided_slice %1 {offsets = [5, 0], sizes = [1, 128], strides = [1, 1]} : vector<8x128xf32> to vector<1x128xf32>
    %36 = vector.broadcast %35 : vector<1x128xf32> to vector<8x128xf32>
    %37 = arith.mulf %34, %36 : vector<8x128xf32>
    %cst_18 = arith.constant dense<0.000000e+00> : vector<8xf32>
    %38 = vector.multi_reduction <add>, %37, %cst_18 [1] : vector<8x128xf32> to vector<8xf32>
    %39 = vector.shape_cast %38 : vector<8xf32> to vector<8x1xf32>
    %40 = vector.extract_strided_slice %1 {offsets = [6, 0], sizes = [1, 128], strides = [1, 1]} : vector<8x128xf32> to vector<1x128xf32>
    %41 = vector.broadcast %39 : vector<8x1xf32> to vector<8x128xf32>
    %42 = vector.broadcast %40 : vector<1x128xf32> to vector<8x128xf32>
    %43 = arith.addf %41, %42 : vector<8x128xf32>
    %44 = arith.negf %43 : vector<8x128xf32>
    %45 = math.exp %44 : vector<8x128xf32>
    %cst_19 = arith.constant 1.000000e+00 : f32
    %46 = vector.broadcast %cst_19 : f32 to vector<8x128xf32>
    %47 = arith.addf %46, %45 : vector<8x128xf32>
    %48 = arith.divf %46, %47 : vector<8x128xf32>
    %49 = tpu.iota {dimensions = array<i32: 1>} : vector<8x128xi32>
    %c16_i32 = arith.constant 16 : i32
    %50 = vector.broadcast %c16_i32 : i32 to vector<8x128xi32>
    %51 = arith.cmpi slt, %49, %50 : vector<8x128xi32>
    %52 = arith.select %51, %21, %48 : vector<8x128xi1>, vector<8x128xf32>
    %c0_20 = arith.constant 0 : index
    %c0_21 = arith.constant 0 : index
    %53 = vector.load %arg7[%c0_20, %c0_21] : memref<8x128xf32, #tpu.memory_space<vmem>>, vector<8x128xf32>
    tpu.vector_store %arg7[%c0_20, %c0_21], %52 {strides = array<i32>} : memref<8x128xf32, #tpu.memory_space<vmem>>, vector<8x128xf32>,
    return
  }
  func.func @transform_0(%arg0: i32) -> (i32, i32) {
    %c0_i32 = arith.constant 0 : i32
    %c0_i32_0 = arith.constant 0 : i32
    return %arg0, %c0_i32 : i32, i32
  }
  func.func @transform_1(%arg0: i32) -> (i32, i32) {
    %c0_i32 = arith.constant 0 : i32
    %c0_i32_0 = arith.constant 0 : i32
    %c0_i32_1 = arith.constant 0 : i32
    return %c0_i32, %c0_i32_0 : i32, i32
  }
  func.func @transform_2(%arg0: i32) -> (i32, i32) {
    %c0_i32 = arith.constant 0 : i32
    %c0_i32_0 = arith.constant 0 : i32
    %c0_i32_1 = arith.constant 0 : i32
    return %c0_i32, %c0_i32_0 : i32, i32
  }
  func.func @transform_3(%arg0: i32) -> (i32, i32) {
    %c0_i32 = arith.constant 0 : i32
    %c0_i32_0 = arith.constant 0 : i32
    %c0_i32_1 = arith.constant 0 : i32
    return %c0_i32, %c0_i32_0 : i32, i32
  }
  func.func @transform_4(%arg0: i32) -> (i32, i32) {
    %c0_i32 = arith.constant 0 : i32
    %c0_i32_0 = arith.constant 0 : i32
    %c0_i32_1 = arith.constant 0 : i32
    return %c0_i32, %c0_i32_0 : i32, i32
  }
  func.func @transform_5(%arg0: i32) -> (i32, i32) {
    %c0_i32 = arith.constant 0 : i32
    %c0_i32_0 = arith.constant 0 : i32
    %c0_i32_1 = arith.constant 0 : i32
    return %c0_i32, %c0_i32_0 : i32, i32
  }
  func.func @transform_6(%arg0: i32) -> (i32, i32) {
    %c0_i32 = arith.constant 0 : i32
    %c0_i32_0 = arith.constant 0 : i32
    return %arg0, %c0_i32 : i32, i32
  }
}

</mosaic_0001>

<llo_original>
// kernel: tpu_custom_call.1
$region0: #{tpu_custom_call.1}
  #allocation0 [shape = 'u32[]', space=smem, size = 0x4, offset = 0x4, fixed_abs, tag = 'smem constant byte address 0x4 - core index']
  #allocation1 [shape = 'u32[72,128]{1,0:T(1,128)}', space=vmem, size = 0x9000, scoped, tag = 'internal scratch']
  %s0 = inlined_call_operand.hbm [shape: f32[8,16], index: 0, kind: input, shape index: {}]
  %s1 = inlined_call_operand.hbm [shape: f32[16,128], index: 1, kind: input, shape index: {}]
  %s2 = inlined_call_operand.hbm [shape: f32[128,128], index: 2, kind: input, shape index: {}]
  %s3 = inlined_call_operand.hbm [shape: f32[128,256], index: 3, kind: input, shape index: {}]
  %s4 = inlined_call_operand.hbm [shape: f32[128,128], index: 4, kind: input, shape index: {}]
  %s5 = inlined_call_operand.hbm [shape: f32[8,128], index: 5, kind: input, shape index: {}]
  %s6 = inlined_call_operand.hbm [shape: f32[8,128], index: 6, kind: output, shape index: {}]
  %s7 = sld [smem:[#allocation0]]
  $region58: #{tpu_custom_call.1} parent=0
    _
  %s9 = ssub.s32 1, %s7
  %s10 = scalar_select 0, %s9, %s7
  $region1: #{tpu_custom_call.1} parent=0
    #allocation2 [shape = 'u8[4096]{0}', space=vmem, size = 0x1000, scoped, tag = 'input window, operand 0, single buffered']
    #allocation3 [shape = 's32[1]{0}', space=sflag, size = 0x4, scoped, tag = 'scoped memory for tpu_custom_call.1']
    #allocation4 [shape = 's32[1]{0}', space=sflag, size = 0x4, scoped, tag = 'scoped memory for tpu_custom_call.1']
    #allocation5 [shape = 'u8[8192]{0}', space=vmem, size = 0x2000, scoped, tag = 'input window, operand 1, single buffered']
    #allocation6 [shape = 's32[1]{0}', space=sflag, size = 0x4, scoped, tag = 'scoped memory for tpu_custom_call.1']
    #allocation7 [shape = 'u8[65536]{0}', space=vmem, size = 0x10000, scoped, tag = 'input window, operand 2, single buffered']
    #allocation8 [shape = 'u8[131072]{0}', space=vmem, size = 0x20000, scoped, tag = 'input window, operand 3, single buffered']
    #allocation9 [shape = 's32[1]{0}', space=sflag, size = 0x4, scoped, tag = 'scoped memory for tpu_custom_call.1']
    #allocation10 [shape = 'u8[65536]{0}', space=vmem, size = 0x10000, scoped, tag = 'input window, operand 4, single buffered']
    #allocation11 [shape = 'u8[4096]{0}', space=vmem, size = 0x1000, scoped, tag = 'input window, operand 5, single buffered']
    #allocation12 [shape = 's32[1]{0}', space=sflag, size = 0x4, scoped, tag = 'scoped memory for tpu_custom_call.1']
    #allocation13 [shape = 'u8[4096]{0}', space=vmem, size = 0x1000, scoped, tag = 'output window, operand 0, single buffered']
    %11 = vsyncpa [#allocation3], 0
    %12 = vsyncpa [#allocation6], 0
    %13 = vsyncpa [#allocation9], 0
    %14 = vsyncpa [#allocation12], 0
    %15 = vsyncpa [#allocation4], 0
    // Predicated region
    $region2: #{tpu_custom_call.1} parent=1 // pred_check
      _
    $region3: #{tpu_custom_call.1} parent=1 // pred_check_branch
      %17 = sbr.rel (0) target = $region5
    $region4: #{tpu_custom_call.1} parent=1 // pred_region
      %19 = vsyncadd [#allocation3], 0
      %s21 = sshll.u32 %s0, 4
      %s22 = int_to_ptr.hbm [resolvable:$true] %s21
      %s23 = sshll.u32 [#allocation2], 4
      %s24 = int_to_ptr.vmem [resolvable:$true] %s23
      %26 = dma.hbm_to_vmem [thread:$0]  %s22, 128, %s24, [#allocation3]
    $region5: #{tpu_custom_call.1} parent=1 // pred_fallthru
      _
    // Predicated region
    $region6: #{tpu_custom_call.1} parent=1 // pred_check
      _
    $region7: #{tpu_custom_call.1} parent=1 // pred_check_branch
      %28 = sbr.rel (0) target = $region9
    $region8: #{tpu_custom_call.1} parent=1 // pred_region
      %30 = vsyncadd [#allocation6], 0
      %s31 = sshll.u32 %s1, 4
      %s32 = int_to_ptr.hbm [resolvable:$true] %s31
      %s33 = sshll.u32 [#allocation5], 4
      %s34 = int_to_ptr.vmem [resolvable:$true] %s33
      %39 = dma.hbm_to_vmem [thread:$0]  %s32, 256, %s34, [#allocation6], 128, 128, 8
    $region9: #{tpu_custom_call.1} parent=1 // pred_fallthru
      _
    // Predicated region
    $region10: #{tpu_custom_call.1} parent=1 // pred_check
      _
    $region11: #{tpu_custom_call.1} parent=1 // pred_check_branch
      %41 = sbr.rel (0) target = $region13
    $region12: #{tpu_custom_call.1} parent=1 // pred_region
      %43 = vsyncadd [#allocation6], 0
      %s44 = sshll.u32 %s2, 4
      %s45 = int_to_ptr.hbm [resolvable:$true] %s44
      %s46 = sshll.u32 [#allocation7], 4
      %s47 = int_to_ptr.vmem [resolvable:$true] %s46
      %52 = dma.hbm_to_vmem [thread:$0]  %s45, 2048, %s47, [#allocation6], 128, 128, 8
    $region13: #{tpu_custom_call.1} parent=1 // pred_fallthru
      _
    // Predicated region
    $region14: #{tpu_custom_call.1} parent=1 // pred_check
      _
    $region15: #{tpu_custom_call.1} parent=1 // pred_check_branch
      %54 = sbr.rel (0) target = $region17
    $region16: #{tpu_custom_call.1} parent=1 // pred_region
      %56 = vsyncadd [#allocation9], 0
      %s57 = sshll.u32 %s3, 4
      %s58 = int_to_ptr.hbm [resolvable:$true] %s57
      %s59 = sshll.u32 [#allocation8], 4
      %s60 = int_to_ptr.vmem [resolvable:$true] %s59
      %65 = dma.hbm_to_vmem [thread:$0]  %s58, 4096, %s60, [#allocation9], 256, 256, 16
    $region17: #{tpu_custom_call.1} parent=1 // pred_fallthru
      _
    // Predicated region
    $region18: #{tpu_custom_call.1} parent=1 // pred_check
      _
    $region19: #{tpu_custom_call.1} parent=1 // pred_check_branch
      %67 = sbr.rel (0) target = $region21
    $region20: #{tpu_custom_call.1} parent=1 // pred_region
      %69 = vsyncadd [#allocation9], 0
      %s70 = sshll.u32 %s4, 4
      %s71 = int_to_ptr.hbm [resolvable:$true] %s70
      %s72 = sshll.u32 [#allocation10], 4
      %s73 = int_to_ptr.vmem [resolvable:$true] %s72
      %78 = dma.hbm_to_vmem [thread:$0]  %s71, 2048, %s73, [#allocation9], 128, 128, 8
    $region21: #{tpu_custom_call.1} parent=1 // pred_fallthru
      _
    // Predicated region
    $region22: #{tpu_custom_call.1} parent=1 // pred_check
      _
    $region23: #{tpu_custom_call.1} parent=1 // pred_check_branch
      %80 = sbr.rel (0) target = $region25
    $region24: #{tpu_custom_call.1} parent=1 // pred_region
      %82 = vsyncadd [#allocation12], 0
      %s84 = sshll.u32 %s5, 4
      %s85 = int_to_ptr.hbm [resolvable:$true] %s84
      %s86 = sshll.u32 [#allocation11], 4
      %s87 = int_to_ptr.vmem [resolvable:$true] %s86
      %89 = dma.hbm_to_vmem [thread:$0]  %s85, 128, %s87, [#allocation12]
    $region25: #{tpu_custom_call.1} parent=1 // pred_fallthru
      _
    // Predicated region
    $region26: #{tpu_custom_call.1} parent=1 // pred_check
      _
    $region27: #{tpu_custom_call.1} parent=1 // pred_check_branch
      %91 = sbr.rel (0) target = $region29
    $region28: #{tpu_custom_call.1} parent=1 // pred_region
      %93 = dma.done [#allocation3], 128
    $region29: #{tpu_custom_call.1} parent=1 // pred_fallthru
      _
    // Predicated region
    $region30: #{tpu_custom_call.1} parent=1 // pred_check
      _
    $region31: #{tpu_custom_call.1} parent=1 // pred_check_branch
      %95 = sbr.rel (0) target = $region33
    $region32: #{tpu_custom_call.1} parent=1 // pred_region
      %97 = dma.done [#allocation6], 256
    $region33: #{tpu_custom_call.1} parent=1 // pred_fallthru
      _
    // Predicated region
    $region34: #{tpu_custom_call.1} parent=1 // pred_check
      _
    $region35: #{tpu_custom_call.1} parent=1 // pred_check_branch
      %99 = sbr.rel (0) target = $region37
    $region36: #{tpu_custom_call.1} parent=1 // pred_region
      %101 = dma.done [#allocation6], 2048
    $region37: #{tpu_custom_call.1} parent=1 // pred_fallthru
      _
    // Predicated region
    $region38: #{tpu_custom_call.1} parent=1 // pred_check
      _
    $region39: #{tpu_custom_call.1} parent=1 // pred_check_branch
      %103 = sbr.rel (0) target = $region41
    $region40: #{tpu_custom_call.1} parent=1 // pred_region
      %105 = dma.done [#allocation9], 4096
    $region41: #{tpu_custom_call.1} parent=1 // pred_fallthru
      _
    // Predicated region
    $region42: #{tpu_custom_call.1} parent=1 // pred_check
      _
    $region43: #{tpu_custom_call.1} parent=1 // pred_check_branch
      %107 = sbr.rel (0) target = $region45
    $region44: #{tpu_custom_call.1} parent=1 // pred_region
      %109 = dma.done [#allocation9], 2048
    $region45: #{tpu_custom_call.1} parent=1 // pred_fallthru
      _
    // Predicated region
    $region46: #{tpu_custom_call.1} parent=1 // pred_check
      _
    $region47: #{tpu_custom_call.1} parent=1 // pred_check_branch
      %111 = sbr.rel (0) target = $region49
    $region48: #{tpu_custom_call.1} parent=1 // pred_region
      %113 = dma.done [#allocation12], 128
    $region49: #{tpu_custom_call.1} parent=1 // pred_fallthru
      _
    %v114 = vld [vmem:[#allocation2] sm:$0xff]
    %v115 = vld [vmem:[#allocation11] sm:$0xff]
    %v116 = vld [vmem:[#allocation5] sm:$0xff]
    %v117 = vld [vmem:[#allocation5 + $0x8] sm:$0xff]
    %v118 = vperm.slane %v115, 0
    %vm119 = vcmask 130048
    %v121 = vsel %vm119, %v114, 0
    %123 = vmatpush.msra.mxu0 0.0
    %124 = vmatpush.msra.mxu0 0.0
    %125 = vmatpush.msra.mxu0 0.0
    %126 = vmatpush.msra.mxu0 0.0
    %127 = vmatpush.msra.mxu0 0.0
    %128 = vmatpush.msra.mxu0 0.0
    %129 = vmatpush.msra.mxu0 0.0
    %130 = vmatpush.msra.mxu0 0.0
    %131 = vmatpush.msra.mxu0 0.0
    %132 = vmatpush.msra.mxu0 0.0
    %133 = vmatpush.msra.mxu0 0.0
    %134 = vmatpush.msra.mxu0 0.0
    %135 = vmatpush.msra.mxu0 0.0
    %136 = vmatpush.msra.mxu0 0.0
    %137 = vmatpush.msra.mxu0 %v117
    %138 = vmatpush.msra.mxu0 %v116
    %139 = vmatmul.f32.gmra.mxu0 %v121
    %v140 = vpop.f32.mrf.mxu0
    %v141 = vadd.f32 %v118, %v140
    %142 = vdwg.mxu0
    %v143 = vmax.f32 %v141, 0.0
    %v144 = vld [vmem:[#allocation7] sm:$0xff]
    %v145 = vld [vmem:[#allocation7 + $0x8] sm:$0xff]
    %v146 = vld [vmem:[#allocation7 + $0x10] sm:$0xff]
    %v147 = vld [vmem:[#allocation7 + $0x18] sm:$0xff]
    %v148 = vld [vmem:[#allocation7 + $0x20] sm:$0xff]
    %v149 = vld [vmem:[#allocation7 + $0x28] sm:$0xff]
    %v150 = vld [vmem:[#allocation7 + $0x30] sm:$0xff]
    %v151 = vld [vmem:[#allocation7 + $0x38] sm:$0xff]
    %v152 = vld [vmem:[#allocation7 + $0x40] sm:$0xff]
    %v153 = vld [vmem:[#allocation7 + $0x48] sm:$0xff]
    %v154 = vld [vmem:[#allocation7 + $0x50] sm:$0xff]
    %v155 = vld [vmem:[#allocation7 + $0x58] sm:$0xff]
    %v156 = vld [vmem:[#allocation7 + $0x60] sm:$0xff]
    %v157 = vld [vmem:[#allocation7 + $0x68] sm:$0xff]
    %v158 = vld [vmem:[#allocation7 + $0x70] sm:$0xff]
    %v159 = vld [vmem:[#allocation7 + $0x78] sm:$0xff]
    %v160 = vperm.slane %v115, 1
    %161 = vmatpush.msra.mxu0 %v159
    %162 = vmatpush.msra.mxu0 %v158
    %163 = vmatpush.msra.mxu0 %v157
    %164 = vmatpush.msra.mxu0 %v156
    %165 = vmatpush.msra.mxu0 %v155
    %166 = vmatpush.msra.mxu0 %v154
    %167 = vmatpush.msra.mxu0 %v153
    %168 = vmatpush.msra.mxu0 %v152
    %169 = vmatpush.msra.mxu0 %v151
    %170 = vmatpush.msra.mxu0 %v150
    %171 = vmatpush.msra.mxu0 %v149
    %172 = vmatpush.msra.mxu0 %v148
    %173 = vmatpush.msra.mxu0 %v147
    %174 = vmatpush.msra.mxu0 %v146
    %175 = vmatpush.msra.mxu0 %v145
    %176 = vmatpush.msra.mxu0 %v144
    %177 = vmatmul.f32.gmra.mxu0 %v143
    %v178 = vpop.f32.mrf.mxu0
    %v179 = vadd.f32 %v160, %v178
    %180 = vdwg.mxu0
    %v181 = vmax.f32 %v179, 0.0
    %v182 = vld [vmem:[#allocation8] sm:$0xff]
    %v183 = vld [vmem:[#allocation8 + $0x8] sm:$0xff]
    %v184 = vld [vmem:[#allocation8 + $0x10] sm:$0xff]
    %v185 = vld [vmem:[#allocation8 + $0x18] sm:$0xff]
    %v186 = vld [vmem:[#allocation8 + $0x20] sm:$0xff]
    %v187 = vld [vmem:[#allocation8 + $0x28] sm:$0xff]
    %v188 = vld [vmem:[#allocation8 + $0x30] sm:$0xff]
    %v189 = vld [vmem:[#allocation8 + $0x38] sm:$0xff]
    %v190 = vld [vmem:[#allocation8 + $0x40] sm:$0xff]
    %v191 = vld [vmem:[#allocation8 + $0x48] sm:$0xff]
    %v192 = vld [vmem:[#allocation8 + $0x50] sm:$0xff]
    %v193 = vld [vmem:[#allocation8 + $0x58] sm:$0xff]
    %v194 = vld [vmem:[#allocation8 + $0x60] sm:$0xff]
    %v195 = vld [vmem:[#allocation8 + $0x68] sm:$0xff]
    %v196 = vld [vmem:[#allocation8 + $0x70] sm:$0xff]
    %v197 = vld [vmem:[#allocation8 + $0x78] sm:$0xff]
    %v198 = vld [vmem:[#allocation8 + $0x80] sm:$0xff]
    %v199 = vld [vmem:[#allocation8 + $0x88] sm:$0xff]
    %v200 = vld [vmem:[#allocation8 + $0x90] sm:$0xff]
    %v201 = vld [vmem:[#allocation8 + $0x98] sm:$0xff]
    %v202 = vld [vmem:[#allocation8 + $0xa0] sm:$0xff]
    %v203 = vld [vmem:[#allocation8 + $0xa8] sm:$0xff]
    %v204 = vld [vmem:[#allocation8 + $0xb0] sm:$0xff]
    %v205 = vld [vmem:[#allocation8 + $0xb8] sm:$0xff]
    %v206 = vld [vmem:[#allocation8 + $0xc0] sm:$0xff]
    %v207 = vld [vmem:[#allocation8 + $0xc8] sm:$0xff]
    %v208 = vld [vmem:[#allocation8 + $0xd0] sm:$0xff]
    %v209 = vld [vmem:[#allocation8 + $0xd8] sm:$0xff]
    %v210 = vld [vmem:[#allocation8 + $0xe0] sm:$0xff]
    %v211 = vld [vmem:[#allocation8 + $0xe8] sm:$0xff]
    %v212 = vld [vmem:[#allocation8 + $0xf0] sm:$0xff]
    %v213 = vld [vmem:[#allocation8 + $0xf8] sm:$0xff]
    %214 = vmatpush.msra.mxu0 %v212
    %215 = vmatpush.msra.mxu0 %v210
    %216 = vmatpush.msra.mxu0 %v208
    %217 = vmatpush.msra.mxu0 %v206
    %218 = vmatpush.msra.mxu0 %v204
    %219 = vmatpush.msra.mxu0 %v202
    %220 = vmatpush.msra.mxu0 %v200
    %221 = vmatpush.msra.mxu0 %v198
    %222 = vmatpush.msra.mxu0 %v196
    %223 = vmatpush.msra.mxu0 %v194
    %224 = vmatpush.msra.mxu0 %v192
    %225 = vmatpush.msra.mxu0 %v190
    %226 = vmatpush.msra.mxu0 %v188
    %227 = vmatpush.msra.mxu0 %v186
    %228 = vmatpush.msra.mxu0 %v184
    %229 = vmatpush.msra.mxu0 %v182
    %230 = vmatmul.f32.gmra.mxu0 %v181
    %v231 = vpop.f32.mrf.mxu0
    %v232 = vadd.f32 0.0, %v231
    %233 = vdwg.mxu0
    %234 = vmatpush.msra.mxu0 %v213
    %235 = vmatpush.msra.mxu0 %v211
    %236 = vmatpush.msra.mxu0 %v209
    %237 = vmatpush.msra.mxu0 %v207
    %238 = vmatpush.msra.mxu0 %v205
    %239 = vmatpush.msra.mxu0 %v203
    %240 = vmatpush.msra.mxu0 %v201
    %241 = vmatpush.msra.mxu0 %v199
    %242 = vmatpush.msra.mxu0 %v197
    %243 = vmatpush.msra.mxu0 %v195
    %244 = vmatpush.msra.mxu0 %v193
    %245 = vmatpush.msra.mxu0 %v191
    %246 = vmatpush.msra.mxu0 %v189
    %247 = vmatpush.msra.mxu0 %v187
    %248 = vmatpush.msra.mxu0 %v185
    %249 = vmatpush.msra.mxu0 %v183
    %250 = vmatmul.f32.gmra.mxu0 %v181
    %v251 = vpop.f32.mrf.mxu0
    %v252 = vadd.f32 0.0, %v251
    %253 = vdwg.mxu0
    %v254 = vperm.slane %v115, 2
    %v255 = vadd.f32 %v232, %v254
    %v256 = vperm.slane %v115, 3
    %v257 = vadd.f32 %v252, %v256
    %v258 = vmax.f32 %v257, 0.0
    %v259 = vld [vmem:[#allocation10] sm:$0xff]
    %v260 = vld [vmem:[#allocation10 + $0x8] sm:$0xff]
    %v261 = vld [vmem:[#allocation10 + $0x10] sm:$0xff]
    %v262 = vld [vmem:[#allocation10 + $0x18] sm:$0xff]
    %v263 = vld [vmem:[#allocation10 + $0x20] sm:$0xff]
    %v264 = vld [vmem:[#allocation10 + $0x28] sm:$0xff]
    %v265 = vld [vmem:[#allocation10 + $0x30] sm:$0xff]
    %v266 = vld [vmem:[#allocation10 + $0x38] sm:$0xff]
    %v267 = vld [vmem:[#allocation10 + $0x40] sm:$0xff]
    %v268 = vld [vmem:[#allocation10 + $0x48] sm:$0xff]
    %v269 = vld [vmem:[#allocation10 + $0x50] sm:$0xff]
    %v270 = vld [vmem:[#allocation10 + $0x58] sm:$0xff]
    %v271 = vld [vmem:[#allocation10 + $0x60] sm:$0xff]
    %v272 = vld [vmem:[#allocation10 + $0x68] sm:$0xff]
    %v273 = vld [vmem:[#allocation10 + $0x70] sm:$0xff]
    %v274 = vld [vmem:[#allocation10 + $0x78] sm:$0xff]
    %v275 = vperm.slane %v115, 4
    %276 = vmatpush.msra.mxu0 %v274
    %277 = vmatpush.msra.mxu0 %v273
    %278 = vmatpush.msra.mxu0 %v272
    %279 = vmatpush.msra.mxu0 %v271
    %280 = vmatpush.msra.mxu0 %v270
    %281 = vmatpush.msra.mxu0 %v269
    %282 = vmatpush.msra.mxu0 %v268
    %283 = vmatpush.msra.mxu0 %v267
    %284 = vmatpush.msra.mxu0 %v266
    %285 = vmatpush.msra.mxu0 %v265
    %286 = vmatpush.msra.mxu0 %v264
    %287 = vmatpush.msra.mxu0 %v263
    %288 = vmatpush.msra.mxu0 %v262
    %289 = vmatpush.msra.mxu0 %v261
    %290 = vmatpush.msra.mxu0 %v260
    %291 = vmatpush.msra.mxu0 %v259
    %292 = vmatmul.f32.gmra.mxu0 %v258
    %v293 = vpop.f32.mrf.mxu0
    %v294 = vadd.f32 %v275, %v293
    %295 = vdwg.mxu0
    %v296 = vmax.f32 %v294, 0.0
    %v297 = vperm.slane %v115, 5
    %v298 = vmul.f32 %v296, %v297
    %299 = vadd.xlane.f32.xlu0 %v298
    %v300 = vpop.xlane.xlu0 %299
    %v301 = vperm.slane %v115, 6
    %v302 = vadd.f32 %v300, %v301
    %v303 = vxor.u32 %v302, 2147483648
    %v304 = vmul.f32 %v303, 1.442695
    %v305 = vpow.pop %v304
    %v306 = vadd.f32 %v305, 1.0
    %v307 = vrcp.pop %v306
    %v308 = vmul.f32 %v306, %v307
    %v309 = vsub.f32 1.0, %v308
    %v310 = vmul.f32 %v307, %v309
    %v311 = vadd.f32 %v307, %v310
    %vm312 = vweird.f32 %v306
    %vm313 = vweird.f32 %v307
    %vm314 = vmor %vm312, %vm313
    %v315 = vsel %vm314, %v307, %v311
    %v316 = vand.u32 2147483647, %v306
    %vm317 = vcmp.eq.f32.partialorder %v316, 8.507059e+37
    %v318 = vand.u32 %v306, 2147483648
    %v319 = vor.u32 1.1754944e-38, %v318
    %v320 = vsel %vm317, %v319, %v315
    %v321 = vmul.f32 1.0, %v320
    %v322 = vlaneseq
    %v323 = vand.u32 %v322, 127
    %vm324 = vcmp.lt.s32.totalorder %v323, 16
    %v325 = vsel %vm324, %v255, %v321
    %326 = vst [vmem:[#allocation13] sm:$0xff] %v325
    // Predicated region
    $region50: #{tpu_custom_call.1} parent=1 // pred_check
      _
    $region51: #{tpu_custom_call.1} parent=1 // pred_check_branch
      %328 = sbr.rel (0) target = $region53
    $region52: #{tpu_custom_call.1} parent=1 // pred_region
      %330 = vsyncadd [#allocation4], 0
      %s332 = sshll.u32 [#allocation13], 4
      %s333 = int_to_ptr.vmem [resolvable:$true] %s332
      %s334 = sshll.u32 %s6, 4
      %s335 = int_to_ptr.hbm [resolvable:$true] %s334
      %337 = dma.vmem_to_hbm [thread:$0]  %s333, 128, %s335, [#allocation4]
    $region53: #{tpu_custom_call.1} parent=1 // pred_fallthru
      _
    // Predicated region
    $region54: #{tpu_custom_call.1} parent=1 // pred_check
      _
    $region55: #{tpu_custom_call.1} parent=1 // pred_check_branch
      %339 = sbr.rel (0) target = $region57
    $region56: #{tpu_custom_call.1} parent=1 // pred_region
      %341 = dma.done [#allocation4], 128
    $region57: #{tpu_custom_call.1} parent=1 // pred_fallthru
      _
    %342 = vsyncpa [#allocation3], 1
    %343 = vsyncpa [#allocation6], 1
    %344 = vsyncpa [#allocation9], 1
    %345 = vsyncpa [#allocation12], 1
    %346 = vsyncpa [#allocation4], 1

// kernel: tpu_custom_call.1
$region0: #{tpu_custom_call.1}
  #allocation0 [shape = 'u32[]', space=smem, size = 0x4, offset = 0x4, fixed_abs, tag = 'smem constant byte address 0x4 - core index']
  #allocation1 [shape = 'u32[72,128]{1,0:T(1,128)}', space=vmem, size = 0x9000, scoped, tag = 'internal scratch']
  %s0 = inlined_call_operand.hbm [shape: f32[8,16], index: 0, kind: input, shape index: {}]
  %s1 = inlined_call_operand.hbm [shape: f32[16,128], index: 1, kind: input, shape index: {}]
  %s2 = inlined_call_operand.hbm [shape: f32[128,128], index: 2, kind: input, shape index: {}]
  %s3 = inlined_call_operand.hbm [shape: f32[128,256], index: 3, kind: input, shape index: {}]
  %s4 = inlined_call_operand.hbm [shape: f32[128,128], index: 4, kind: input, shape index: {}]
  %s5 = inlined_call_operand.hbm [shape: f32[8,128], index: 5, kind: input, shape index: {}]
  %s6 = inlined_call_operand.hbm [shape: f32[8,128], index: 6, kind: output, shape index: {}]
  %s7 = sld [smem:[#allocation0]]
  $region58: #{tpu_custom_call.1} parent=0
    _
  %s9 = ssub.s32 1, %s7
  %s10 = scalar_select 0, %s9, %s7
  $region1: #{tpu_custom_call.1} parent=0
    #allocation2 [shape = 'u8[4096]{0}', space=vmem, size = 0x1000, scoped, tag = 'input window, operand 0, single buffered']
    #allocation3 [shape = 's32[1]{0}', space=sflag, size = 0x4, scoped, tag = 'scoped memory for tpu_custom_call.1']
    #allocation4 [shape = 's32[1]{0}', space=sflag, size = 0x4, scoped, tag = 'scoped memory for tpu_custom_call.1']
    #allocation5 [shape = 'u8[8192]{0}', space=vmem, size = 0x2000, scoped, tag = 'input window, operand 1, single buffered']
    #allocation6 [shape = 's32[1]{0}', space=sflag, size = 0x4, scoped, tag = 'scoped memory for tpu_custom_call.1']
    #allocation7 [shape = 'u8[65536]{0}', space=vmem, size = 0x10000, scoped, tag = 'input window, operand 2, single buffered']
    #allocation8 [shape = 'u8[131072]{0}', space=vmem, size = 0x20000, scoped, tag = 'input window, operand 3, single buffered']
    #allocation9 [shape = 's32[1]{0}', space=sflag, size = 0x4, scoped, tag = 'scoped memory for tpu_custom_call.1']
    #allocation10 [shape = 'u8[65536]{0}', space=vmem, size = 0x10000, scoped, tag = 'input window, operand 4, single buffered']
    #allocation11 [shape = 'u8[4096]{0}', space=vmem, size = 0x1000, scoped, tag = 'input window, operand 5, single buffered']
    #allocation12 [shape = 's32[1]{0}', space=sflag, size = 0x4, scoped, tag = 'scoped memory for tpu_custom_call.1']
    #allocation13 [shape = 'u8[4096]{0}', space=vmem, size = 0x1000, scoped, tag = 'output window, operand 0, single buffered']
    %11 = vsyncpa [#allocation3], 0
    %12 = vsyncpa [#allocation6], 0
    %13 = vsyncpa [#allocation9], 0
    %14 = vsyncpa [#allocation12], 0
    %15 = vsyncpa [#allocation4], 0
    // Predicated region
    $region2: #{tpu_custom_call.1} parent=1 // pred_check
      _
    $region3: #{tpu_custom_call.1} parent=1 // pred_check_branch
      %17 = sbr.rel (0) target = $region5
    $region4: #{tpu_custom_call.1} parent=1 // pred_region
      %19 = vsyncadd [#allocation3], 0
      %s21 = sshll.u32 %s0, 4
      %s22 = int_to_ptr.hbm [resolvable:$true] %s21
      %s23 = sshll.u32 [#allocation2], 4
      %s24 = int_to_ptr.vmem [resolvable:$true] %s23
      %26 = dma.hbm_to_vmem [thread:$0]  %s22, 128, %s24, [#allocation3]
    $region5: #{tpu_custom_call.1} parent=1 // pred_fallthru
      _
    // Predicated region
    $region6: #{tpu_custom_call.1} parent=1 // pred_check
      _
    $region7: #{tpu_custom_call.1} parent=1 // pred_check_branch
      %28 = sbr.rel (0) target = $region9
    $region8: #{tpu_custom_call.1} parent=1 // pred_region
      %30 = vsyncadd [#allocation6], 0
      %s31 = sshll.u32 %s1, 4
      %s32 = int_to_ptr.hbm [resolvable:$true] %s31
      %s33 = sshll.u32 [#allocation5], 4
      %s34 = int_to_ptr.vmem [resolvable:$true] %s33
      %39 = dma.hbm_to_vmem [thread:$0]  %s32, 256, %s34, [#allocation6], 128, 128, 8
    $region9: #{tpu_custom_call.1} parent=1 // pred_fallthru
      _
    // Predicated region
    $region10: #{tpu_custom_call.1} parent=1 // pred_check
      _
    $region11: #{tpu_custom_call.1} parent=1 // pred_check_branch
      %41 = sbr.rel (0) target = $region13
    $region12: #{tpu_custom_call.1} parent=1 // pred_region
      %43 = vsyncadd [#allocation6], 0
      %s44 = sshll.u32 %s2, 4
      %s45 = int_to_ptr.hbm [resolvable:$true] %s44
      %s46 = sshll.u32 [#allocation7], 4
      %s47 = int_to_ptr.vmem [resolvable:$true] %s46
      %52 = dma.hbm_to_vmem [thread:$0]  %s45, 2048, %s47, [#allocation6], 128, 128, 8
    $region13: #{tpu_custom_call.1} parent=1 // pred_fallthru
      _
    // Predicated region
    $region14: #{tpu_custom_call.1} parent=1 // pred_check
      _
    $region15: #{tpu_custom_call.1} parent=1 // pred_check_branch
      %54 = sbr.rel (0) target = $region17
    $region16: #{tpu_custom_call.1} parent=1 // pred_region
      %56 = vsyncadd [#allocation9], 0
      %s57 = sshll.u32 %s3, 4
      %s58 = int_to_ptr.hbm [resolvable:$true] %s57
      %s59 = sshll.u32 [#allocation8], 4
      %s60 = int_to_ptr.vmem [resolvable:$true] %s59
      %65 = dma.hbm_to_vmem [thread:$0]  %s58, 4096, %s60, [#allocation9], 256, 256, 16
    $region17: #{tpu_custom_call.1} parent=1 // pred_fallthru
      _
    // Predicated region
    $region18: #{tpu_custom_call.1} parent=1 // pred_check
      _
    $region19: #{tpu_custom_call.1} parent=1 // pred_check_branch
      %67 = sbr.rel (0) target = $region21
    $region20: #{tpu_custom_call.1} parent=1 // pred_region
      %69 = vsyncadd [#allocation9], 0
      %s70 = sshll.u32 %s4, 4
      %s71 = int_to_ptr.hbm [resolvable:$true] %s70
      %s72 = sshll.u32 [#allocation10], 4
      %s73 = int_to_ptr.vmem [resolvable:$true] %s72
      %78 = dma.hbm_to_vmem [thread:$0]  %s71, 2048, %s73, [#allocation9], 128, 128, 8
    $region21: #{tpu_custom_call.1} parent=1 // pred_fallthru
      _
    // Predicated region
    $region22: #{tpu_custom_call.1} parent=1 // pred_check
      _
    $region23: #{tpu_custom_call.1} parent=1 // pred_check_branch
      %80 = sbr.rel (0) target = $region25
    $region24: #{tpu_custom_call.1} parent=1 // pred_region
      %82 = vsyncadd [#allocation12], 0
      %s84 = sshll.u32 %s5, 4
      %s85 = int_to_ptr.hbm [resolvable:$true] %s84
      %s86 = sshll.u32 [#allocation11], 4
      %s87 = int_to_ptr.vmem [resolvable:$true] %s86
      %89 = dma.hbm_to_vmem [thread:$0]  %s85, 128, %s87, [#allocation12]
    $region25: #{tpu_custom_call.1} parent=1 // pred_fallthru
      _
    // Predicated region
    $region26: #{tpu_custom_call.1} parent=1 // pred_check
      _
    $region27: #{tpu_custom_call.1} parent=1 // pred_check_branch
      %91 = sbr.rel (0) target = $region29
    $region28: #{tpu_custom_call.1} parent=1 // pred_region
      %93 = dma.done [#allocation3], 128
    $region29: #{tpu_custom_call.1} parent=1 // pred_fallthru
      _
    // Predicated region
    $region30: #{tpu_custom_call.1} parent=1 // pred_check
      _
    $region31: #{tpu_custom_call.1} parent=1 // pred_check_branch
      %95 = sbr.rel (0) target = $region33
    $region32: #{tpu_custom_call.1} parent=1 // pred_region
      %97 = dma.done [#allocation6], 256
    $region33: #{tpu_custom_call.1} parent=1 // pred_fallthru
      _
    // Predicated region
    $region34: #{tpu_custom_call.1} parent=1 // pred_check
      _
    $region35: #{tpu_custom_call.1} parent=1 // pred_check_branch
      %99 = sbr.rel (0) target = $region37
    $region36: #{tpu_custom_call.1} parent=1 // pred_region
      %101 = dma.done [#allocation6], 2048
    $region37: #{tpu_custom_call.1} parent=1 // pred_fallthru
      _
    // Predicated region
    $region38: #{tpu_custom_call.1} parent=1 // pred_check
      _
    $region39: #{tpu_custom_call.1} parent=1 // pred_check_branch
      %103 = sbr.rel (0) target = $region41
    $region40: #{tpu_custom_call.1} parent=1 // pred_region
      %105 = dma.done [#allocation9], 4096
    $region41: #{tpu_custom_call.1} parent=1 // pred_fallthru
      _
    // Predicated region
    $region42: #{tpu_custom_call.1} parent=1 // pred_check
      _
    $region43: #{tpu_custom_call.1} parent=1 // pred_check_branch
      %107 = sbr.rel (0) target = $region45
    $region44: #{tpu_custom_call.1} parent=1 // pred_region
      %109 = dma.done [#allocation9], 2048
    $region45: #{tpu_custom_call.1} parent=1 // pred_fallthru
      _
    // Predicated region
    $region46: #{tpu_custom_call.1} parent=1 // pred_check
      _
    $region47: #{tpu_custom_call.1} parent=1 // pred_check_branch
      %111 = sbr.rel (0) target = $region49
    $region48: #{tpu_custom_call.1} parent=1 // pred_region
      %113 = dma.done [#allocation12], 128
    $region49: #{tpu_custom_call.1} parent=1 // pred_fallthru
      _
    %v114 = vld [vmem:[#allocation2] sm:$0xff]
    %v115 = vld [vmem:[#allocation11] sm:$0xff]
    %v116 = vld [vmem:[#allocation5] sm:$0xff]
    %v117 = vld [vmem:[#allocation5 + $0x8] sm:$0xff]
    %v118 = vperm.slane %v115, 0
    %vm119 = vcmask 130048
    %v121 = vsel %vm119, %v114, 0
    %123 = vmatpush.msra.mxu0 0.0
    %124 = vmatpush.msra.mxu0 0.0
    %125 = vmatpush.msra.mxu0 0.0
    %126 = vmatpush.msra.mxu0 0.0
    %127 = vmatpush.msra.mxu0 0.0
    %128 = vmatpush.msra.mxu0 0.0
    %129 = vmatpush.msra.mxu0 0.0
    %130 = vmatpush.msra.mxu0 0.0
    %131 = vmatpush.msra.mxu0 0.0
    %132 = vmatpush.msra.mxu0 0.0
    %133 = vmatpush.msra.mxu0 0.0
    %134 = vmatpush.msra.mxu0 0.0
    %135 = vmatpush.msra.mxu0 0.0
    %136 = vmatpush.msra.mxu0 0.0
    %137 = vmatpush.msra.mxu0 %v117
    %138 = vmatpush.msra.mxu0 %v116
    %139 = vmatmul.f32.gmra.mxu0 %v121
    %v140 = vpop.f32.mrf.mxu0
    %v141 = vadd.f32 %v118, %v140
    %142 = vdwg.mxu0
    %v143 = vmax.f32 %v141, 0.0
    %v144 = vld [vmem:[#allocation7] sm:$0xff]
    %v145 = vld [vmem:[#allocation7 + $0x8] sm:$0xff]
    %v146 = vld [vmem:[#allocation7 + $0x10] sm:$0xff]
    %v147 = vld [vmem:[#allocation7 + $0x18] sm:$0xff]
    %v148 = vld [vmem:[#allocation7 + $0x20] sm:$0xff]
    %v149 = vld [vmem:[#allocation7 + $0x28] sm:$0xff]
    %v150 = vld [vmem:[#allocation7 + $0x30] sm:$0xff]
    %v151 = vld [vmem:[#allocation7 + $0x38] sm:$0xff]
    %v152 = vld [vmem:[#allocation7 + $0x40] sm:$0xff]
    %v153 = vld [vmem:[#allocation7 + $0x48] sm:$0xff]
    %v154 = vld [vmem:[#allocation7 + $0x50] sm:$0xff]
    %v155 = vld [vmem:[#allocation7 + $0x58] sm:$0xff]
    %v156 = vld [vmem:[#allocation7 + $0x60] sm:$0xff]
    %v157 = vld [vmem:[#allocation7 + $0x68] sm:$0xff]
    %v158 = vld [vmem:[#allocation7 + $0x70] sm:$0xff]
    %v159 = vld [vmem:[#allocation7 + $0x78] sm:$0xff]
    %v160 = vperm.slane %v115, 1
    %161 = vmatpush.msra.mxu0 %v159
    %162 = vmatpush.msra.mxu0 %v158
    %163 = vmatpush.msra.mxu0 %v157
    %164 = vmatpush.msra.mxu0 %v156
    %165 = vmatpush.msra.mxu0 %v155
    %166 = vmatpush.msra.mxu0 %v154
    %167 = vmatpush.msra.mxu0 %v153
    %168 = vmatpush.msra.mxu0 %v152
    %169 = vmatpush.msra.mxu0 %v151
    %170 = vmatpush.msra.mxu0 %v150
    %171 = vmatpush.msra.mxu0 %v149
    %172 = vmatpush.msra.mxu0 %v148
    %173 = vmatpush.msra.mxu0 %v147
    %174 = vmatpush.msra.mxu0 %v146
    %175 = vmatpush.msra.mxu0 %v145
    %176 = vmatpush.msra.mxu0 %v144
    %177 = vmatmul.f32.gmra.mxu0 %v143
    %v178 = vpop.f32.mrf.mxu0
    %v179 = vadd.f32 %v160, %v178
    %180 = vdwg.mxu0
    %v181 = vmax.f32 %v179, 0.0
    %v182 = vld [vmem:[#allocation8] sm:$0xff]
    %v183 = vld [vmem:[#allocation8 + $0x8] sm:$0xff]
    %v184 = vld [vmem:[#allocation8 + $0x10] sm:$0xff]
    %v185 = vld [vmem:[#allocation8 + $0x18] sm:$0xff]
    %v186 = vld [vmem:[#allocation8 + $0x20] sm:$0xff]
    %v187 = vld [vmem:[#allocation8 + $0x28] sm:$0xff]
    %v188 = vld [vmem:[#allocation8 + $0x30] sm:$0xff]
    %v189 = vld [vmem:[#allocation8 + $0x38] sm:$0xff]
    %v190 = vld [vmem:[#allocation8 + $0x40] sm:$0xff]
    %v191 = vld [vmem:[#allocation8 + $0x48] sm:$0xff]
    %v192 = vld [vmem:[#allocation8 + $0x50] sm:$0xff]
    %v193 = vld [vmem:[#allocation8 + $0x58] sm:$0xff]
    %v194 = vld [vmem:[#allocation8 + $0x60] sm:$0xff]
    %v195 = vld [vmem:[#allocation8 + $0x68] sm:$0xff]
    %v196 = vld [vmem:[#allocation8 + $0x70] sm:$0xff]
    %v197 = vld [vmem:[#allocation8 + $0x78] sm:$0xff]
    %v198 = vld [vmem:[#allocation8 + $0x80] sm:$0xff]
    %v199 = vld [vmem:[#allocation8 + $0x88] sm:$0xff]
    %v200 = vld [vmem:[#allocation8 + $0x90] sm:$0xff]
    %v201 = vld [vmem:[#allocation8 + $0x98] sm:$0xff]
    %v202 = vld [vmem:[#allocation8 + $0xa0] sm:$0xff]
    %v203 = vld [vmem:[#allocation8 + $0xa8] sm:$0xff]
    %v204 = vld [vmem:[#allocation8 + $0xb0] sm:$0xff]
    %v205 = vld [vmem:[#allocation8 + $0xb8] sm:$0xff]
    %v206 = vld [vmem:[#allocation8 + $0xc0] sm:$0xff]
    %v207 = vld [vmem:[#allocation8 + $0xc8] sm:$0xff]
    %v208 = vld [vmem:[#allocation8 + $0xd0] sm:$0xff]
    %v209 = vld [vmem:[#allocation8 + $0xd8] sm:$0xff]
    %v210 = vld [vmem:[#allocation8 + $0xe0] sm:$0xff]
    %v211 = vld [vmem:[#allocation8 + $0xe8] sm:$0xff]
    %v212 = vld [vmem:[#allocation8 + $0xf0] sm:$0xff]
    %v213 = vld [vmem:[#allocation8 + $0xf8] sm:$0xff]
    %214 = vmatpush.msra.mxu0 %v212
    %215 = vmatpush.msra.mxu0 %v210
    %216 = vmatpush.msra.mxu0 %v208
    %217 = vmatpush.msra.mxu0 %v206
    %218 = vmatpush.msra.mxu0 %v204
    %219 = vmatpush.msra.mxu0 %v202
    %220 = vmatpush.msra.mxu0 %v200
    %221 = vmatpush.msra.mxu0 %v198
    %222 = vmatpush.msra.mxu0 %v196
    %223 = vmatpush.msra.mxu0 %v194
    %224 = vmatpush.msra.mxu0 %v192
    %225 = vmatpush.msra.mxu0 %v190
    %226 = vmatpush.msra.mxu0 %v188
    %227 = vmatpush.msra.mxu0 %v186
    %228 = vmatpush.msra.mxu0 %v184
    %229 = vmatpush.msra.mxu0 %v182
    %230 = vmatmul.f32.gmra.mxu0 %v181
    %v231 = vpop.f32.mrf.mxu0
    %v232 = vadd.f32 0.0, %v231
    %233 = vdwg.mxu0
    %234 = vmatpush.msra.mxu0 %v213
    %235 = vmatpush.msra.mxu0 %v211
    %236 = vmatpush.msra.mxu0 %v209
    %237 = vmatpush.msra.mxu0 %v207
    %238 = vmatpush.msra.mxu0 %v205
    %239 = vmatpush.msra.mxu0 %v203
    %240 = vmatpush.msra.mxu0 %v201
    %241 = vmatpush.msra.mxu0 %v199
    %242 = vmatpush.msra.mxu0 %v197
    %243 = vmatpush.msra.mxu0 %v195
    %244 = vmatpush.msra.mxu0 %v193
    %245 = vmatpush.msra.mxu0 %v191
    %246 = vmatpush.msra.mxu0 %v189
    %247 = vmatpush.msra.mxu0 %v187
    %248 = vmatpush.msra.mxu0 %v185
    %249 = vmatpush.msra.mxu0 %v183
    %250 = vmatmul.f32.gmra.mxu0 %v181
    %v251 = vpop.f32.mrf.mxu0
    %v252 = vadd.f32 0.0, %v251
    %253 = vdwg.mxu0
    %v254 = vperm.slane %v115, 2
    %v255 = vadd.f32 %v232, %v254
    %v256 = vperm.slane %v115, 3
    %v257 = vadd.f32 %v252, %v256
    %v258 = vmax.f32 %v257, 0.0
    %v259 = vld [vmem:[#allocation10] sm:$0xff]
    %v260 = vld [vmem:[#allocation10 + $0x8] sm:$0xff]
    %v261 = vld [vmem:[#allocation10 + $0x10] sm:$0xff]
    %v262 = vld [vmem:[#allocation10 + $0x18] sm:$0xff]
    %v263 = vld [vmem:[#allocation10 + $0x20] sm:$0xff]
    %v264 = vld [vmem:[#allocation10 + $0x28] sm:$0xff]
    %v265 = vld [vmem:[#allocation10 + $0x30] sm:$0xff]
    %v266 = vld [vmem:[#allocation10 + $0x38] sm:$0xff]
    %v267 = vld [vmem:[#allocation10 + $0x40] sm:$0xff]
    %v268 = vld [vmem:[#allocation10 + $0x48] sm:$0xff]
    %v269 = vld [vmem:[#allocation10 + $0x50] sm:$0xff]
    %v270 = vld [vmem:[#allocation10 + $0x58] sm:$0xff]
    %v271 = vld [vmem:[#allocation10 + $0x60] sm:$0xff]
    %v272 = vld [vmem:[#allocation10 + $0x68] sm:$0xff]
    %v273 = vld [vmem:[#allocation10 + $0x70] sm:$0xff]
    %v274 = vld [vmem:[#allocation10 + $0x78] sm:$0xff]
    %v275 = vperm.slane %v115, 4
    %276 = vmatpush.msra.mxu0 %v274
    %277 = vmatpush.msra.mxu0 %v273
    %278 = vmatpush.msra.mxu0 %v272
    %279 = vmatpush.msra.mxu0 %v271
    %280 = vmatpush.msra.mxu0 %v270
    %281 = vmatpush.msra.mxu0 %v269
    %282 = vmatpush.msra.mxu0 %v268
    %283 = vmatpush.msra.mxu0 %v267
    %284 = vmatpush.msra.mxu0 %v266
    %285 = vmatpush.msra.mxu0 %v265
    %286 = vmatpush.msra.mxu0 %v264
    %287 = vmatpush.msra.mxu0 %v263
    %288 = vmatpush.msra.mxu0 %v262
    %289 = vmatpush.msra.mxu0 %v261
    %290 = vmatpush.msra.mxu0 %v260
    %291 = vmatpush.msra.mxu0 %v259
    %292 = vmatmul.f32.gmra.mxu0 %v258
    %v293 = vpop.f32.mrf.mxu0
    %v294 = vadd.f32 %v275, %v293
    %295 = vdwg.mxu0
    %v296 = vmax.f32 %v294, 0.0
    %v297 = vperm.slane %v115, 5
    %v298 = vmul.f32 %v296, %v297
    %299 = vadd.xlane.f32.xlu0 %v298
    %v300 = vpop.xlane.xlu0 %299
    %v301 = vperm.slane %v115, 6
    %v302 = vadd.f32 %v300, %v301
    %v303 = vxor.u32 %v302, 2147483648
    %v304 = vmul.f32 %v303, 1.442695
    %v305 = vpow.pop %v304
    %v306 = vadd.f32 %v305, 1.0
    %v307 = vrcp.pop %v306
    %v308 = vmul.f32 %v306, %v307
    %v309 = vsub.f32 1.0, %v308
    %v310 = vmul.f32 %v307, %v309
    %v311 = vadd.f32 %v307, %v310
    %vm312 = vweird.f32 %v306
    %vm313 = vweird.f32 %v307
    %vm314 = vmor %vm312, %vm313
    %v315 = vsel %vm314, %v307, %v311
    %v316 = vand.u32 2147483647, %v306
    %vm317 = vcmp.eq.f32.partialorder %v316, 8.507059e+37
    %v318 = vand.u32 %v306, 2147483648
    %v319 = vor.u32 1.1754944e-38, %v318
    %v320 = vsel %vm317, %v319, %v315
    %v321 = vmul.f32 1.0, %v320
    %v322 = vlaneseq
    %v323 = vand.u32 %v322, 127
    %vm324 = vcmp.lt.s32.totalorder %v323, 16
    %v325 = vsel %vm324, %v255, %v321
    %326 = vst [vmem:[#allocation13] sm:$0xff] %v325
    // Predicated region
    $region50: #{tpu_custom_call.1} parent=1 // pred_check
      _
    $region51: #{tpu_custom_call.1} parent=1 // pred_check_branch
      %328 = sbr.rel (0) target = $region53
    $region52: #{tpu_custom_call.1} parent=1 // pred_region
      %330 = vsyncadd [#allocation4], 0
      %s332 = sshll.u32 [#allocation13], 4
      %s333 = int_to_ptr.vmem [resolvable:$true] %s332
      %s334 = sshll.u32 %s6, 4
      %s335 = int_to_ptr.hbm [resolvable:$true] %s334
      %337 = dma.vmem_to_hbm [thread:$0]  %s333, 128, %s335, [#allocation4]
    $region53: #{tpu_custom_call.1} parent=1 // pred_fallthru
      _
    // Predicated region
    $region54: #{tpu_custom_call.1} parent=1 // pred_check
      _
    $region55: #{tpu_custom_call.1} parent=1 // pred_check_branch
      %339 = sbr.rel (0) target = $region57
    $region56: #{tpu_custom_call.1} parent=1 // pred_region
      %341 = dma.done [#allocation4], 128
    $region57: #{tpu_custom_call.1} parent=1 // pred_fallthru
      _
    %342 = vsyncpa [#allocation3], 1
    %343 = vsyncpa [#allocation6], 1
    %344 = vsyncpa [#allocation9], 1
    %345 = vsyncpa [#allocation12], 1
    %346 = vsyncpa [#allocation4], 1

</llo_original>
